<compile_context>
chip_gen: v7x
topology: tpu7x:2x2x1
jax: 0.10.0
libtpu: 0.0.40
codegen_flags: <defaults>
</compile_context>

<pallas_src>
import functools

import jax
import jax.numpy as jnp
from jax.experimental import pallas as pl
from jax.experimental.pallas import tpu as pltpu

EPS = 1e-5  # PyTorch BatchNorm1d default eps


def _lfsurv_kernel(w1a_ref, w1b_ref, b1_ref, w2_ref, c_ref, lat_ref, clin_ref,
                   out_ref, *, compute_dtype):
    """One batch tile; batch ends up on the lane axis.

    w1a_ref : (H, L)  BN1-folded c_fc1 weight, latent columns   (resident)
    w1b_ref : (H, C)  c_fc1 weight, real clinical columns       (resident)
    b1_ref  : (H, 1)  BN1-folded c_fc1 bias column (f32)        (resident)
    w2_ref  : (H, 1)  BN2-folded c_fc2 weight column (f32)      (resident)
    c_ref   : (1, 1)  BN2-folded scalar offset (f32)            (resident)
    lat_ref : (TB, L) latent batch tile, natural layout         (streamed)
    clin_ref: (TB, C) clinical batch tile, natural layout       (streamed)
    out_ref : (1, TB) lane-dense risk scores for this tile
    """
    # In-kernel cast to the MXU compute dtype (VPU, hidden under the tile DMA);
    # keeps the streamed HBM bytes at the caller's dtype with no host astype.
    lat = lat_ref[...].astype(compute_dtype)      # (TB, L)
    clin = clin_ref[...].astype(compute_dtype)    # (TB, C)

    # (H, TB) = W1a @ lat^T + W1b @ clin^T, f32 accumulation.  Contracting the
    # trailing feature dims puts the batch on the lane axis without any
    # host-side transpose/concat of the batch data.
    acc = jnp.einsum("hk,bk->hb", w1a_ref[...], lat,
                     preferred_element_type=jnp.float32)
    acc = acc + jnp.einsum("hk,bk->hb", w1b_ref[...], clin,
                           preferred_element_type=jnp.float32)

    # tanh epilogue in compute_dtype (bf16 doubles EUP throughput on v6e/v7x,
    # where the transcendental slot is otherwise the binding unit at full BW).
    h = jnp.tanh((acc + b1_ref[...]).astype(compute_dtype))

    # Final Linear(H, 1) + folded BN2: f32 multiply + sublane (XLU) reduce —
    # avoids an N=1 MXU pass and keeps the output lane-dense.
    red = jnp.sum(h.astype(jnp.float32) * w2_ref[...], axis=0, keepdims=True)
    out_ref[...] = red + c_ref[...]


def _round_up(x, m):
    return (x + m - 1) // m * m


def lfsurv_forward(latent, clinical, params, *, latent_dim, input_n, level_2_dim,
                   compute_dtype=jnp.bfloat16, batch_tile=None):
    """Fold BN into the linears and call the Pallas kernel on natural-layout inputs."""
    B, L = latent.shape
    C = clinical.shape[1]
    H = level_2_dim
    assert L == latent_dim, "latent width mismatch"
    assert 1 <= C <= input_n - latent_dim, (
        "clinical features wider than the reserved (input_n - latent_dim) slots")
    assert params["w1"].shape == (level_2_dim, input_n), "level_2_dim/input_n mismatch"

    # ---- fold eval-mode BatchNorms into the linear layers (one-time, tiny) ----
    scale1 = params["g1"] * jax.lax.rsqrt(params["rv1"] + EPS)        # (L,)
    shift1 = params["be1"] - params["rm1"] * scale1                    # (L,)
    w1a = params["w1"][:, :latent_dim]                                 # (H, L)
    w1b = params["w1"][:, latent_dim:latent_dim + C]                   # (H, C) pad cols dropped
    w1a_f = (w1a * scale1[None, :]).astype(compute_dtype)              # (H, L)
    w1b_f = w1b.astype(compute_dtype)                                  # (H, C)
    b1_col = (params["b1"] + w1a @ shift1).reshape(H, 1).astype(jnp.float32)

    scale2 = params["g2"] * jax.lax.rsqrt(params["rv2"] + EPS)         # (H,)
    w2_row = params["w2"][0]                                           # (H,)
    w2_col = (scale2 * w2_row).reshape(H, 1).astype(jnp.float32)
    c_arr = jnp.dot(params["be2"] - params["rm2"] * scale2,
                    w2_row).reshape(1, 1).astype(jnp.float32)

    # ---- batch tiling: large tiles, >=2 grid steps when the batch allows -----
    itemsize = max(jnp.dtype(latent.dtype).itemsize,
                   jnp.dtype(clinical.dtype).itemsize)
    if batch_tile is None:
        batch_tile = 8192 if itemsize <= 2 else 4096
    batch_tile = max(128, _round_up(batch_tile, 128))

    if B <= batch_tile:
        if B >= 1024:
            # Split into (at least) two grid steps so both v7x TensorCores work.
            tb = _round_up(pl.cdiv(B, 2), 128)
        else:
            tb = B          # single exact tile: no padding, no masking needed
    else:
        tb = batch_tile
    grid = (pl.cdiv(B, tb),)   # ragged last tile handled by Pallas masking

    cost = pl.CostEstimate(
        flops=2 * B * (L + C) * H + 4 * B * H,
        transcendentals=B * H,
        bytes_accessed=B * (L + C) * itemsize + 4 * B + 4 * H * (L + C + 3),
    )

    out = pl.pallas_call(
        functools.partial(_lfsurv_kernel, compute_dtype=compute_dtype),
        out_shape=jax.ShapeDtypeStruct((1, B), jnp.float32),
        grid=grid,
        in_specs=[
            pl.BlockSpec((H, L), lambda i: (0, 0)),     # W1a' (resident)
            pl.BlockSpec((H, C), lambda i: (0, 0)),     # W1b  (resident)
            pl.BlockSpec((H, 1), lambda i: (0, 0)),     # b1'  (resident)
            pl.BlockSpec((H, 1), lambda i: (0, 0)),     # w2'  (resident)
            pl.BlockSpec((1, 1), lambda i: (0, 0)),     # c    (resident)
            pl.BlockSpec((tb, L), lambda i: (i, 0)),    # latent tile   (streamed)
            pl.BlockSpec((tb, C), lambda i: (i, 0)),    # clinical tile (streamed)
        ],
        out_specs=pl.BlockSpec((1, tb), lambda i: (0, i)),
        compiler_params=pltpu.CompilerParams(
            dimension_semantics=("parallel",),
            # Headroom for larger batch_tile overrides; below physical VMEM on
            # v5e/v6e (128 MiB) and v7x (64 MiB).
            vmem_limit_bytes=48 * 1024 * 1024,
        ),
        cost_estimate=cost,
    )(w1a_f, w1b_f, b1_col, w2_col, c_arr, latent, clinical)

    return out[0].reshape(B, 1)


def make_params(key, latent_dim, input_n, level_2_dim):
    """Deterministic synthetic parameters (shapes match LFSurv.__init__)."""
    ks = jax.random.split(key, 10)
    bound1 = 1.0 / jnp.sqrt(input_n)
    return {
        # c_bn_input (BatchNorm1d(latent_dim)) — eval-mode running stats
        "g1":  1.0 + 0.1 * jax.random.normal(ks[0], (latent_dim,), jnp.float32),
        "be1": 0.1 * jax.random.normal(ks[1], (latent_dim,), jnp.float32),
        "rm1": 0.1 * jax.random.normal(ks[2], (latent_dim,), jnp.float32),
        "rv1": 1.0 + 0.1 * jax.random.uniform(ks[3], (latent_dim,), jnp.float32),
        # c_fc1: Linear(input_n, level_2_dim)
        "w1": jax.random.uniform(ks[4], (level_2_dim, input_n), jnp.float32,
                                 -bound1, bound1),
        "b1": jax.random.uniform(ks[5], (level_2_dim,), jnp.float32,
                                 -bound1, bound1),
        # c_bn2 (BatchNorm1d(level_2_dim))
        "g2":  1.0 + 0.1 * jax.random.normal(ks[6], (level_2_dim,), jnp.float32),
        "be2": 0.1 * jax.random.normal(ks[7], (level_2_dim,), jnp.float32),
        "rm2": 0.1 * jax.random.normal(ks[8], (level_2_dim,), jnp.float32),
        "rv2": 1.0 + 0.1 * jax.random.uniform(ks[9], (level_2_dim,), jnp.float32),
        # c_fc2: Linear(level_2_dim, 1, bias=False), uniform(-0.001, 0.001)
        "w2": jax.random.uniform(jax.random.fold_in(key, 99),
                                 (1, level_2_dim), jnp.float32, -0.001, 0.001),
    }


def reference_forward(latent, clinical, params, *, latent_dim, input_n, level_2_dim):
    """Pure-JAX reference mirroring the PyTorch forward (eval mode)."""
    rest = input_n - latent_dim
    lat_bn = (latent - params["rm1"]) / jnp.sqrt(params["rv1"] + EPS) \
             * params["g1"] + params["be1"]
    clin = clinical
    if clin.shape[1] < rest:
        clin = jnp.pad(clin, ((0, 0), (0, rest - clin.shape[1])))
    combined = jnp.concatenate([lat_bn, clin], axis=1)
    h = jnp.tanh(combined @ params["w1"].T + params["b1"])
    h_bn = (h - params["rm2"]) / jnp.sqrt(params["rv2"] + EPS) \
           * params["g2"] + params["be2"]
    return h_bn @ params["w2"].T


if __name__ == "__main__":
    latent_dim = 16
    input_n = 32          # latent_dim + clinical slots
    level_2_dim = 32
    clin_dim = 8          # < input_n - latent_dim -> exercises padding semantics

    key = jax.random.PRNGKey(0)
    k_lat, k_clin, k_par, k_lat2, k_clin2 = jax.random.split(key, 5)
    params = make_params(k_par, latent_dim, input_n, level_2_dim)

    # --- small batch: single exact tile -------------------------------------
    B_small = 8
    latent = jax.random.normal(k_lat, (B_small, latent_dim), jnp.float32)
    clinical = jax.random.normal(k_clin, (B_small, clin_dim), jnp.float32)

    y_ref = reference_forward(latent, clinical, params,
                              latent_dim=latent_dim, input_n=input_n,
                              level_2_dim=level_2_dim)

    # f32 compute path: tight tolerance vs the reference.
    y32 = lfsurv_forward(latent, clinical, params,
                         latent_dim=latent_dim, input_n=input_n,
                         level_2_dim=level_2_dim,
                         compute_dtype=jnp.float32)
    y32 = jax.block_until_ready(y32)
    assert y32.shape == (B_small, 1)
    assert jnp.allclose(y32, y_ref, atol=1e-5, rtol=1e-4)

    # Default bf16 MXU/tanh compute (f32 accumulate/epilogue): looser tolerance.
    y16 = lfsurv_forward(latent, clinical, params,
                         latent_dim=latent_dim, input_n=input_n,
                         level_2_dim=level_2_dim)
    y16 = jax.block_until_ready(y16)
    assert jnp.allclose(y16, y_ref, atol=1e-2, rtol=5e-2)

    # --- larger batch: multi-step parallel grid with a ragged last tile ------
    B_big = 2500
    latent_b = jax.random.normal(k_lat2, (B_big, latent_dim), jnp.float32)
    clinical_b = jax.random.normal(k_clin2, (B_big, clin_dim), jnp.float32)
    y_ref_b = reference_forward(latent_b, clinical_b, params,
                                latent_dim=latent_dim, input_n=input_n,
                                level_2_dim=level_2_dim)
    y_b = lfsurv_forward(latent_b, clinical_b, params,
                         latent_dim=latent_dim, input_n=input_n,
                         level_2_dim=level_2_dim,
                         compute_dtype=jnp.float32)
    y_b = jax.block_until_ready(y_b)
    assert y_b.shape == (B_big, 1)
    assert jnp.allclose(y_b, y_ref_b, atol=1e-5, rtol=1e-4)

    # TODO(synk): dropout (s_dropout=True) and training-mode BatchNorm batch
    # statistics are not implemented; this kernel reproduces the inference path.
    print("KERNEL_OK")
</pallas_src>

<mosaic_0001>
module attributes {stable_mosaic.version = 11 : i64} {
  func.func @_lfsurv_kernel(%arg0: i32, %arg1: memref<32x16xf32, #tpu.memory_space<vmem>>, %arg2: memref<32x8xf32, #tpu.memory_space<vmem>>, %arg3: memref<32x1xf32, #tpu.memory_space<vmem>>, %arg4: memref<32x1xf32, #tpu.memory_space<vmem>>, %arg5: memref<1x1xf32, #tpu.memory_space<vmem>>, %arg6: memref<8x16xf32, #tpu.memory_space<vmem>>, %arg7: memref<8x8xf32, #tpu.memory_space<vmem>>, %arg8: memref<1x8xf32, #tpu.memory_space<vmem>>) attributes {dimension_semantics = [#tpu.dimension_semantics<parallel>], iteration_bounds = array<i64: 1>, scalar_prefetch = 0 : i64, scratch_operands = 0 : i64, tpu.core_type = #tpu.core_type<tc>, window_params = [{pipeline_mode = #tpu.pipeline_mode<synchronous>, transform_indices = @transform_0, window_bounds = array<i64: 32, 16>}, {pipeline_mode = #tpu.pipeline_mode<synchronous>, transform_indices = @transform_1, window_bounds = array<i64: 32, 8>}, {pipeline_mode = #tpu.pipeline_mode<synchronous>, transform_indices = @transform_2, window_bounds = array<i64: 32, 1>}, {pipeline_mode = #tpu.pipeline_mode<synchronous>, transform_indices = @transform_3, window_bounds = array<i64: 32, 1>}, {pipeline_mode = #tpu.pipeline_mode<synchronous>, transform_indices = @transform_4, window_bounds = array<i64: 1, 1>}, {transform_indices = @transform_5, window_bounds = array<i64: 8, 16>}, {transform_indices = @transform_6, window_bounds = array<i64: 8, 8>}, {transform_indices = @transform_7, window_bounds = array<i64: 1, 8>}]} {
    %c0 = arith.constant 0 : index
    %c0_0 = arith.constant 0 : index
    %0 = vector.load %arg6[%c0, %c0_0] : memref<8x16xf32, #tpu.memory_space<vmem>>, vector<8x16xf32>
    %c0_1 = arith.constant 0 : index
    %c0_2 = arith.constant 0 : index
    %1 = vector.load %arg7[%c0_1, %c0_2] : memref<8x8xf32, #tpu.memory_space<vmem>>, vector<8x8xf32>
    %c0_3 = arith.constant 0 : index
    %c0_4 = arith.constant 0 : index
    %2 = vector.load %arg1[%c0_3, %c0_4] : memref<32x16xf32, #tpu.memory_space<vmem>>, vector<32x16xf32>
    "tpu.trace_start"() <{level = 10 : i32, message = "hk,bk->hb"}> : () -> ()
    %cst = arith.constant dense<0.000000e+00> : vector<32x8xf32>
    %3 = tpu.matmul %2, %0, %cst {dimension_numbers = #tpu.dot_dimension_numbers<[1], [1], [0], [0], [0, 0, 1, 0], [], []>} : vector<32x16xf32>, vector<8x16xf32>, vector<32x8xf32> -> vector<32x8xf32>
    "tpu.trace_stop"() : () -> ()
    %c0_5 = arith.constant 0 : index
    %c0_6 = arith.constant 0 : index
    %4 = vector.load %arg2[%c0_5, %c0_6] : memref<32x8xf32, #tpu.memory_space<vmem>>, vector<32x8xf32>
    "tpu.trace_start"() <{level = 10 : i32, message = "hk,bk->hb"}> : () -> ()
    %cst_7 = arith.constant dense<0.000000e+00> : vector<32x8xf32>
    %5 = tpu.matmul %4, %1, %cst_7 {dimension_numbers = #tpu.dot_dimension_numbers<[1], [1], [0], [0], [0, 0, 1, 0], [], []>} : vector<32x8xf32>, vector<8x8xf32>, vector<32x8xf32> -> vector<32x8xf32>
    "tpu.trace_stop"() : () -> ()
    %6 = arith.addf %3, %5 : vector<32x8xf32>
    %c0_8 = arith.constant 0 : index
    %c0_9 = arith.constant 0 : index
    %7 = vector.load %arg3[%c0_8, %c0_9] : memref<32x1xf32, #tpu.memory_space<vmem>>, vector<32x1xf32>
    %8 = vector.broadcast %7 : vector<32x1xf32> to vector<32x8xf32>
    %9 = arith.addf %6, %8 : vector<32x8xf32>
    %10 = math.tanh %9 : vector<32x8xf32>
    %c0_10 = arith.constant 0 : index
    %c0_11 = arith.constant 0 : index
    %11 = vector.load %arg4[%c0_10, %c0_11] : memref<32x1xf32, #tpu.memory_space<vmem>>, vector<32x1xf32>
    %12 = vector.broadcast %11 : vector<32x1xf32> to vector<32x8xf32>
    %13 = arith.mulf %10, %12 : vector<32x8xf32>
    %cst_12 = arith.constant dense<0.000000e+00> : vector<8xf32>
    %14 = vector.multi_reduction <add>, %13, %cst_12 [0] : vector<32x8xf32> to vector<8xf32>
    %15 = vector.shape_cast %14 : vector<8xf32> to vector<1x8xf32>
    %c0_13 = arith.constant 0 : index
    %c0_14 = arith.constant 0 : index
    %16 = vector.load %arg5[%c0_13, %c0_14] : memref<1x1xf32, #tpu.memory_space<vmem>>, vector<1x1xf32>
    %17 = vector.broadcast %16 : vector<1x1xf32> to vector<1x8xf32>
    %18 = arith.addf %15, %17 : vector<1x8xf32>
    %c0_15 = arith.constant 0 : index
    %c0_16 = arith.constant 0 : index
    %19 = vector.load %arg8[%c0_15, %c0_16] : memref<1x8xf32, #tpu.memory_space<vmem>>, vector<1x8xf32>
    tpu.vector_store %arg8[%c0_15, %c0_16], %18 {strides = array<i32>} : memref<1x8xf32, #tpu.memory_space<vmem>>, vector<1x8xf32>,
    return
  }
  func.func @transform_0(%arg0: i32) -> (i32, i32) {
    %c0_i32 = arith.constant 0 : i32
    %c0_i32_0 = arith.constant 0 : i32
    %c0_i32_1 = arith.constant 0 : i32
    return %c0_i32, %c0_i32_0 : i32, i32
  }
  func.func @transform_1(%arg0: i32) -> (i32, i32) {
    %c0_i32 = arith.constant 0 : i32
    %c0_i32_0 = arith.constant 0 : i32
    %c0_i32_1 = arith.constant 0 : i32
    return %c0_i32, %c0_i32_0 : i32, i32
  }
  func.func @transform_2(%arg0: i32) -> (i32, i32) {
    %c0_i32 = arith.constant 0 : i32
    %c0_i32_0 = arith.constant 0 : i32
    %c0_i32_1 = arith.constant 0 : i32
    return %c0_i32, %c0_i32_0 : i32, i32
  }
  func.func @transform_3(%arg0: i32) -> (i32, i32) {
    %c0_i32 = arith.constant 0 : i32
    %c0_i32_0 = arith.constant 0 : i32
    %c0_i32_1 = arith.constant 0 : i32
    return %c0_i32, %c0_i32_0 : i32, i32
  }
  func.func @transform_4(%arg0: i32) -> (i32, i32) {
    %c0_i32 = arith.constant 0 : i32
    %c0_i32_0 = arith.constant 0 : i32
    %c0_i32_1 = arith.constant 0 : i32
    return %c0_i32, %c0_i32_0 : i32, i32
  }
  func.func @transform_5(%arg0: i32) -> (i32, i32) {
    %c0_i32 = arith.constant 0 : i32
    %c0_i32_0 = arith.constant 0 : i32
    return %arg0, %c0_i32 : i32, i32
  }
  func.func @transform_6(%arg0: i32) -> (i32, i32) {
    %c0_i32 = arith.constant 0 : i32
    %c0_i32_0 = arith.constant 0 : i32
    return %arg0, %c0_i32 : i32, i32
  }
  func.func @transform_7(%arg0: i32) -> (i32, i32) {
    %c0_i32 = arith.constant 0 : i32
    %c0_i32_0 = arith.constant 0 : i32
    return %c0_i32, %arg0 : i32, i32
  }
}

</mosaic_0001>

<llo_original>
// kernel: tpu_custom_call.1
$region0: #{tpu_custom_call.1}
  #allocation0 [shape = 'u32[]', space=smem, size = 0x4, offset = 0x4, fixed_abs, tag = 'smem constant byte address 0x4 - core index']
  #allocation1 [shape = 'u32[144,128]{1,0:T(1,128)}', space=vmem, size = 0x12000, scoped, tag = 'internal scratch']
  #allocation2 [shape = 'f32[1,1]{1,0:T(1,128)S(1)}', space=vmem, size = 0x200, scoped, tag = 'scoped memory for tpu_custom_call.1']
  %s0 = inlined_call_operand.vmem [shape: f32[32,16], index: 0, kind: input, shape index: {}]
  %s1 = inlined_call_operand.vmem [shape: f32[32,8], index: 1, kind: input, shape index: {}]
  %s2 = inlined_call_operand.vmem [shape: f32[32,1], index: 2, kind: input, shape index: {}]
  %s3 = inlined_call_operand.vmem [shape: f32[32,1], index: 3, kind: input, shape index: {}]
  %s4 = inlined_call_operand.<no memory space> [shape: f32[1,1], index: 4, kind: input, shape index: {}]
  %s5 = inlined_call_operand.vmem [shape: f32[8,16], index: 5, kind: input, shape index: {}]
  %s6 = inlined_call_operand.vmem [shape: f32[8,8], index: 6, kind: input, shape index: {}]
  %s7 = inlined_call_operand.hbm [shape: f32[1,8], index: 7, kind: output, shape index: {}]
  %s8 = sld [smem:[#allocation0]]
  $region38: #{tpu_custom_call.1} parent=0
    _
  %s10 = ssub.s32 1, %s8
  %s11 = scalar_select 0, %s10, %s8
  %v12 = vstv %s4
  %13 = vst [vmem:[#allocation2] sm:$0x1] %v12
  $region1: #{tpu_custom_call.1} parent=0
    #allocation3 [shape = 'u8[512]{0}', space=vmem, size = 0x400, scoped, tag = 'output window, operand 0, single buffered']
    #allocation4 [shape = 's32[1]{0}', space=sflag, size = 0x4, scoped, tag = 'scoped memory for tpu_custom_call.1']
    %14 = vsyncpa [#allocation4], 0
    // Predicated region
    $region2: #{tpu_custom_call.1} parent=1 // pred_check
      _
    $region3: #{tpu_custom_call.1} parent=1 // pred_check_branch
      %16 = sbr.rel (0) target = $region5
    $region4: #{tpu_custom_call.1} parent=1 // pred_region
      _
    $region5: #{tpu_custom_call.1} parent=1 // pred_fallthru
      _
    // Predicated region
    $region6: #{tpu_custom_call.1} parent=1 // pred_check
      _
    $region7: #{tpu_custom_call.1} parent=1 // pred_check_branch
      %18 = sbr.rel (0) target = $region9
    $region8: #{tpu_custom_call.1} parent=1 // pred_region
      _
    $region9: #{tpu_custom_call.1} parent=1 // pred_fallthru
      _
    // Predicated region
    $region10: #{tpu_custom_call.1} parent=1 // pred_check
      _
    $region11: #{tpu_custom_call.1} parent=1 // pred_check_branch
      %20 = sbr.rel (0) target = $region13
    $region12: #{tpu_custom_call.1} parent=1 // pred_region
      _
    $region13: #{tpu_custom_call.1} parent=1 // pred_fallthru
      _
    // Predicated region
    $region14: #{tpu_custom_call.1} parent=1 // pred_check
      _
    $region15: #{tpu_custom_call.1} parent=1 // pred_check_branch
      %22 = sbr.rel (0) target = $region17
    $region16: #{tpu_custom_call.1} parent=1 // pred_region
      _
    $region17: #{tpu_custom_call.1} parent=1 // pred_fallthru
      _
    // Predicated region
    $region18: #{tpu_custom_call.1} parent=1 // pred_check
      _
    $region19: #{tpu_custom_call.1} parent=1 // pred_check_branch
      %24 = sbr.rel (0) target = $region21
    $region20: #{tpu_custom_call.1} parent=1 // pred_region
      _
    $region21: #{tpu_custom_call.1} parent=1 // pred_fallthru
      _
    // Predicated region
    $region22: #{tpu_custom_call.1} parent=1 // pred_check
      _
    $region23: #{tpu_custom_call.1} parent=1 // pred_check_branch
      %26 = sbr.rel (0) target = $region25
    $region24: #{tpu_custom_call.1} parent=1 // pred_region
      _
    $region25: #{tpu_custom_call.1} parent=1 // pred_fallthru
      _
    // Predicated region
    $region26: #{tpu_custom_call.1} parent=1 // pred_check
      _
    $region27: #{tpu_custom_call.1} parent=1 // pred_check_branch
      %28 = sbr.rel (0) target = $region29
    $region28: #{tpu_custom_call.1} parent=1 // pred_region
      _
    $region29: #{tpu_custom_call.1} parent=1 // pred_fallthru
      _
    %v29 = vld [vmem:[%s5] sm:$0xff]
    %v30 = vld [vmem:[%s6] sm:$0xff]
    %v31 = vld [vmem:[%s0] sm:$0xff]
    %v32 = vld [vmem:[%s0 + $0x8] sm:$0xff]
    %v33 = vld [vmem:[%s0 + $0x10] sm:$0xff]
    %v34 = vld [vmem:[%s0 + $0x18] sm:$0xff]
    %v35 = vld [vmem:[%s1] sm:$0xff]
    %v36 = vld [vmem:[%s1 + $0x8] sm:$0xff]
    %v37 = vld [vmem:[%s1 + $0x10] sm:$0xff]
    %v38 = vld [vmem:[%s1 + $0x18] sm:$0xff]
    %vm39 = vcmask 64512
    %v41 = vsel %vm39, %v35, 0
    %v44 = vsel %vm39, %v36, 0
    %v47 = vsel %vm39, %v37, 0
    %v50 = vsel %vm39, %v38, 0
    %v53 = vsel %vm39, %v30, 0
    %55 = vmatprep.subr.mxu0 0.0
    %56 = vmatpush1.xpose.msra.mxu0 %v53
    %57 = vmatprep.subr.mxu0 0.0
    %58 = vmatpush1.xpose.msra.mxu0 0.0
    %59 = vmatprep.subr.mxu0 0.0
    %60 = vmatpush1.xpose.msra.mxu0 0.0
    %61 = vmatprep.subr.mxu0 0.0
    %62 = vmatpush1.xpose.msra.mxu0 0.0
    %63 = vmatprep.subr.mxu0 0.0
    %64 = vmatpush1.xpose.msra.mxu0 0.0
    %65 = vmatprep.subr.mxu0 0.0
    %66 = vmatpush1.xpose.msra.mxu0 0.0
    %67 = vmatprep.subr.mxu0 0.0
    %68 = vmatpush1.xpose.msra.mxu0 0.0
    %69 = vmatprep.subr.mxu0 0.0
    %70 = vmatpush1.xpose.msra.mxu0 0.0
    %71 = vmatprep.subr.mxu0 0.0
    %72 = vmatpush1.xpose.msra.mxu0 0.0
    %73 = vmatprep.subr.mxu0 0.0
    %74 = vmatpush1.xpose.msra.mxu0 0.0
    %75 = vmatprep.subr.mxu0 0.0
    %76 = vmatpush1.xpose.msra.mxu0 0.0
    %77 = vmatprep.subr.mxu0 0.0
    %78 = vmatpush1.xpose.msra.mxu0 0.0
    %79 = vmatprep.subr.mxu0 0.0
    %80 = vmatpush1.xpose.msra.mxu0 0.0
    %81 = vmatprep.subr.mxu0 0.0
    %82 = vmatpush1.xpose.msra.mxu0 0.0
    %83 = vmatprep.subr.mxu0 0.0
    %84 = vmatpush1.xpose.msra.mxu0 0.0
    %85 = vmatprep.subr.mxu0 0.0
    %86 = vmatpush1.xpose.msra.mxu0 0.0
    %87 = vmatprep.subr.mxu0 0.0
    %88 = vmatpush1.xpose.msra.mxu0 0.0
    %89 = vmatprep.subr.mxu0 0.0
    %90 = vmatpush1.xpose.msra.mxu0 0.0
    %91 = vmatprep.subr.mxu0 0.0
    %92 = vmatpush1.xpose.msra.mxu0 0.0
    %93 = vmatprep.subr.mxu0 0.0
    %94 = vmatpush1.xpose.msra.mxu0 0.0
    %95 = vmatprep.subr.mxu0 0.0
    %96 = vmatpush1.xpose.msra.mxu0 0.0
    %97 = vmatprep.subr.mxu0 0.0
    %98 = vmatpush1.xpose.msra.mxu0 0.0
    %99 = vmatprep.subr.mxu0 0.0
    %100 = vmatpush1.xpose.msra.mxu0 0.0
    %101 = vmatprep.subr.mxu0 0.0
    %102 = vmatpush1.xpose.msra.mxu0 0.0
    %103 = vmatprep.subr.mxu0 0.0
    %104 = vmatpush1.xpose.msra.mxu0 0.0
    %105 = vmatprep.subr.mxu0 0.0
    %106 = vmatpush1.xpose.msra.mxu0 0.0
    %107 = vmatprep.subr.mxu0 0.0
    %108 = vmatpush1.xpose.msra.mxu0 0.0
    %109 = vmatprep.subr.mxu0 0.0
    %110 = vmatpush1.xpose.msra.mxu0 0.0
    %111 = vmatprep.subr.mxu0 0.0
    %112 = vmatpush1.xpose.msra.mxu0 0.0
    %113 = vmatprep.subr.mxu0 0.0
    %114 = vmatpush1.xpose.msra.mxu0 0.0
    %115 = vmatprep.subr.mxu0 0.0
    %116 = vmatpush1.xpose.msra.mxu0 0.0
    %117 = vmatprep.subr.mxu0 0.0
    %118 = vmatpush1.xpose.msra.mxu0 0.0
    %119 = vmatprep.mubr.f32.mxu0 0.0
    %120 = vmatmul.mubr.f32.gmra.mrb[0].mxu0 %v41
    %v121 = vpop.f32.mrb[0].mxu0
    %v122 = vadd.f32 0.0, %v121
    %v123 = vpop.f32.mrb[0].mxu0
    %124 = vmatprep.mubr.f32.mxu0 0.0
    %125 = vmatmul.mubr.f32.gmra.mrb[0].mxu0 %v44
    %v126 = vpop.f32.mrb[0].mxu0
    %v127 = vadd.f32 0.0, %v126
    %v128 = vpop.f32.mrb[0].mxu0
    %129 = vmatprep.mubr.f32.mxu0 0.0
    %130 = vmatmul.mubr.f32.gmra.mrb[0].mxu0 %v47
    %v131 = vpop.f32.mrb[0].mxu0
    %v132 = vadd.f32 0.0, %v131
    %v133 = vpop.f32.mrb[0].mxu0
    %134 = vmatprep.mubr.f32.mxu0 0.0
    %135 = vmatmul.mubr.f32.gmra.mrb[0].mxu0 %v50
    %v136 = vpop.f32.mrb[0].mxu0
    %v137 = vadd.f32 0.0, %v136
    %v138 = vpop.f32.mrb[0].mxu0
    %139 = vdwg.mxu0
    %vm140 = vcmask 130048
    %v142 = vsel %vm140, %v31, 0
    %v145 = vsel %vm140, %v32, 0
    %v148 = vsel %vm140, %v33, 0
    %v151 = vsel %vm140, %v34, 0
    %v154 = vsel %vm140, %v29, 0
    %156 = vmatprep.subr.mxu0 0.0
    %157 = vmatpush1.xpose.msra.mxu0 %v154
    %158 = vmatprep.subr.mxu0 0.0
    %159 = vmatpush1.xpose.msra.mxu0 0.0
    %160 = vmatprep.subr.mxu0 0.0
    %161 = vmatpush1.xpose.msra.mxu0 0.0
    %162 = vmatprep.subr.mxu0 0.0
    %163 = vmatpush1.xpose.msra.mxu0 0.0
    %164 = vmatprep.subr.mxu0 0.0
    %165 = vmatpush1.xpose.msra.mxu0 0.0
    %166 = vmatprep.subr.mxu0 0.0
    %167 = vmatpush1.xpose.msra.mxu0 0.0
    %168 = vmatprep.subr.mxu0 0.0
    %169 = vmatpush1.xpose.msra.mxu0 0.0
    %170 = vmatprep.subr.mxu0 0.0
    %171 = vmatpush1.xpose.msra.mxu0 0.0
    %172 = vmatprep.subr.mxu0 0.0
    %173 = vmatpush1.xpose.msra.mxu0 0.0
    %174 = vmatprep.subr.mxu0 0.0
    %175 = vmatpush1.xpose.msra.mxu0 0.0
    %176 = vmatprep.subr.mxu0 0.0
    %177 = vmatpush1.xpose.msra.mxu0 0.0
    %178 = vmatprep.subr.mxu0 0.0
    %179 = vmatpush1.xpose.msra.mxu0 0.0
    %180 = vmatprep.subr.mxu0 0.0
    %181 = vmatpush1.xpose.msra.mxu0 0.0
    %182 = vmatprep.subr.mxu0 0.0
    %183 = vmatpush1.xpose.msra.mxu0 0.0
    %184 = vmatprep.subr.mxu0 0.0
    %185 = vmatpush1.xpose.msra.mxu0 0.0
    %186 = vmatprep.subr.mxu0 0.0
    %187 = vmatpush1.xpose.msra.mxu0 0.0
    %188 = vmatprep.subr.mxu0 0.0
    %189 = vmatpush1.xpose.msra.mxu0 0.0
    %190 = vmatprep.subr.mxu0 0.0
    %191 = vmatpush1.xpose.msra.mxu0 0.0
    %192 = vmatprep.subr.mxu0 0.0
    %193 = vmatpush1.xpose.msra.mxu0 0.0
    %194 = vmatprep.subr.mxu0 0.0
    %195 = vmatpush1.xpose.msra.mxu0 0.0
    %196 = vmatprep.subr.mxu0 0.0
    %197 = vmatpush1.xpose.msra.mxu0 0.0
    %198 = vmatprep.subr.mxu0 0.0
    %199 = vmatpush1.xpose.msra.mxu0 0.0
    %200 = vmatprep.subr.mxu0 0.0
    %201 = vmatpush1.xpose.msra.mxu0 0.0
    %202 = vmatprep.subr.mxu0 0.0
    %203 = vmatpush1.xpose.msra.mxu0 0.0
    %204 = vmatprep.subr.mxu0 0.0
    %205 = vmatpush1.xpose.msra.mxu0 0.0
    %206 = vmatprep.subr.mxu0 0.0
    %207 = vmatpush1.xpose.msra.mxu0 0.0
    %208 = vmatprep.subr.mxu0 0.0
    %209 = vmatpush1.xpose.msra.mxu0 0.0
    %210 = vmatprep.subr.mxu0 0.0
    %211 = vmatpush1.xpose.msra.mxu0 0.0
    %212 = vmatprep.subr.mxu0 0.0
    %213 = vmatpush1.xpose.msra.mxu0 0.0
    %214 = vmatprep.subr.mxu0 0.0
    %215 = vmatpush1.xpose.msra.mxu0 0.0
    %216 = vmatprep.subr.mxu0 0.0
    %217 = vmatpush1.xpose.msra.mxu0 0.0
    %218 = vmatprep.subr.mxu0 0.0
    %219 = vmatpush1.xpose.msra.mxu0 0.0
    %220 = vmatprep.mubr.f32.mxu0 0.0
    %221 = vmatmul.mubr.f32.gmra.mrb[0].mxu0 %v142
    %v222 = vpop.f32.mrb[0].mxu0
    %v223 = vadd.f32 %v122, %v222
    %v224 = vpop.f32.mrb[0].mxu0
    %225 = vmatprep.mubr.f32.mxu0 0.0
    %226 = vmatmul.mubr.f32.gmra.mrb[0].mxu0 %v145
    %v227 = vpop.f32.mrb[0].mxu0
    %v228 = vadd.f32 %v127, %v227
    %v229 = vpop.f32.mrb[0].mxu0
    %230 = vmatprep.mubr.f32.mxu0 0.0
    %231 = vmatmul.mubr.f32.gmra.mrb[0].mxu0 %v148
    %v232 = vpop.f32.mrb[0].mxu0
    %v233 = vadd.f32 %v132, %v232
    %v234 = vpop.f32.mrb[0].mxu0
    %235 = vmatprep.mubr.f32.mxu0 0.0
    %236 = vmatmul.mubr.f32.gmra.mrb[0].mxu0 %v151
    %v237 = vpop.f32.mrb[0].mxu0
    %v238 = vadd.f32 %v137, %v237
    %v239 = vpop.f32.mrb[0].mxu0
    %240 = vdwg.mxu0
    %v241 = vld [vmem:[%s2] sm:$0xff]
    %v242 = vld [vmem:[%s2 + $0x8] sm:$0xff]
    %v243 = vld [vmem:[%s2 + $0x10] sm:$0xff]
    %v244 = vld [vmem:[%s2 + $0x18] sm:$0xff]
    %246 = vset.pattern.permute.xlu0 0
    %247 = vperm.xlu0 %246, %v241
    %v248 = vpop.permute.xlu0 %247
    %251 = vset.pattern.permute.xlu0 0
    %252 = vperm.xlu0 %251, %v242
    %v253 = vpop.permute.xlu0 %252
    %256 = vset.pattern.permute.xlu0 0
    %257 = vperm.xlu0 %256, %v243
    %v258 = vpop.permute.xlu0 %257
    %261 = vset.pattern.permute.xlu0 0
    %262 = vperm.xlu0 %261, %v244
    %v263 = vpop.permute.xlu0 %262
    %v265 = vadd.f32 %v223, %v248
    %v266 = vadd.f32 %v228, %v253
    %v267 = vadd.f32 %v233, %v258
    %v268 = vadd.f32 %v238, %v263
    %v269 = vtanh.pop %v265
    %v270 = vtanh.pop %v266
    %v271 = vtanh.pop %v267
    %v272 = vtanh.pop %v268
    %v273 = vld [vmem:[%s3] sm:$0xff]
    %v274 = vld [vmem:[%s3 + $0x8] sm:$0xff]
    %v275 = vld [vmem:[%s3 + $0x10] sm:$0xff]
    %v276 = vld [vmem:[%s3 + $0x18] sm:$0xff]
    %278 = vset.pattern.permute.xlu0 0
    %279 = vperm.xlu0 %278, %v273
    %v280 = vpop.permute.xlu0 %279
    %283 = vset.pattern.permute.xlu0 0
    %284 = vperm.xlu0 %283, %v274
    %v285 = vpop.permute.xlu0 %284
    %288 = vset.pattern.permute.xlu0 0
    %289 = vperm.xlu0 %288, %v275
    %v290 = vpop.permute.xlu0 %289
    %293 = vset.pattern.permute.xlu0 0
    %294 = vperm.xlu0 %293, %v276
    %v295 = vpop.permute.xlu0 %294
    %v297 = vmul.f32 %v269, %v280
    %v298 = vmul.f32 %v270, %v285
    %v299 = vmul.f32 %v271, %v290
    %v300 = vmul.f32 %v272, %v295
    %v301 = vsel %vm39, %v297, 0.0
    %v302 = vsel %vm39, %v298, 0.0
    %v303 = vadd.f32 %v301, %v302
    %v304 = vsel %vm39, %v299, 0.0
    %v305 = vadd.f32 %v303, %v304
    %v306 = vsel %vm39, %v300, 0.0
    %v307 = vadd.f32 %v305, %v306
    %v308 = vrot.slane %v307, 4
    %v309 = vadd.f32 %v307, %v308
    %v310 = vrot.slane %v309, 2
    %v311 = vadd.f32 %v309, %v310
    %v312 = vrot.slane %v311, 1
    %v313 = vadd.f32 %v311, %v312
    %v314 = vld [vmem:[#allocation2] sm:$0x1]
    %316 = vset.pattern.permute.xlu0 0
    %317 = vperm.xlu0 %316, %v314
    %v318 = vpop.permute.xlu0 %317
    %v320 = vlaneseq
    %v321 = vshrl.u32 %v320, 7
    %v322 = vsub.s32 0, %v321
    %v323 = vrot.slane %v318, %v322
    %v324 = vadd.f32 %v313, %v323
    %vm325 = vcmask 57344
    %326 = vst.msk [vmem:[#allocation3] sm:$0x1] %vm325, %v324
    // Predicated region
    $region30: #{tpu_custom_call.1} parent=1 // pred_check
      _
    $region31: #{tpu_custom_call.1} parent=1 // pred_check_branch
      %328 = sbr.rel (0) target = $region33
    $region32: #{tpu_custom_call.1} parent=1 // pred_region
      %s330 = ssub.s32 16, 16
      %331 = vsyncadd [#allocation4], %s330
      %s333 = sshll.u32 [#allocation3], 4
      %s334 = int_to_ptr.vmem [resolvable:$true] %s333
      %336 = dma.vmem_to_hbm [thread:$0]  %s334, 16, %s7, [#allocation4]
    $region33: #{tpu_custom_call.1} parent=1 // pred_fallthru
      _
    // Predicated region
    $region34: #{tpu_custom_call.1} parent=1 // pred_check
      _
    $region35: #{tpu_custom_call.1} parent=1 // pred_check_branch
      %338 = sbr.rel (0) target = $region37
    $region36: #{tpu_custom_call.1} parent=1 // pred_region
      %339 = dma.done [#allocation4], 16
    $region37: #{tpu_custom_call.1} parent=1 // pred_fallthru
      _
    %340 = vsyncpa [#allocation4], 1

</llo_original>
